<compile_context>
chip_gen: v6e
topology: v6e:2x2x1
jax: 0.10.0
libtpu: 0.0.40
codegen_flags: <defaults>
</compile_context>

<pallas_src>
import functools

import jax
import jax.numpy as jnp
from jax.experimental import pallas as pl
from jax.experimental.pallas import tpu as pltpu


def _self_attn_kernel(xt_cd_ref,   # (n_pad, c_pad)  compute_dtype, resident per batch
                      xt_res_ref,  # (tile_q, c_pad) f32, this query tile (residual)
                      k_ref,       # (c_pad, n_pad)  compute_dtype, resident per batch
                      wqt_ref,     # (c_pad, c_pad)  compute_dtype (Wq^T)
                      bq_ref,      # (1, c_pad)      f32
                      kbias_ref,   # (1, n_pad)      f32  (0 valid / -1e30 padded key)
                      gamma_ref,   # (1, 1)          f32, SMEM
                      out_ref,     # (tile_q, c_pad) f32   -> out in (N, C) layout
                      attn_ref,    # (tile_q, n_pad) attn_dtype
                      *, tile_q, compute_dtype, exp_dtype, approx_recip):
    qt = pl.program_id(1)
    row0 = pl.multiple_of(qt * tile_q, tile_q)

    # Query tile of x^T, already in compute dtype (cast once in the wrapper).
    x_tile = xt_cd_ref[pl.ds(row0, tile_q), :]                       # (TQ, Cp)

    # 1x1 query conv: Q_tile = x_tile @ Wq^T + bq   (canonical matmul, f32 acc).
    q = jnp.dot(x_tile, wqt_ref[...],
                preferred_element_type=jnp.float32) + bq_ref[...]    # (TQ, Cp) f32

    # energy = Q_tile @ K   (canonical (M,K)x(K,N)) + additive key-padding bias.
    energy = jnp.dot(q.astype(compute_dtype), k_ref[...],
                     preferred_element_type=jnp.float32) + kbias_ref[...]  # (TQ, Np)

    # Numerically-stable softmax; exponent optionally bf16 (v6e/v7x), stats f32.
    m = jnp.max(energy, axis=-1, keepdims=True)                      # (TQ, 1) f32
    e = jnp.exp((energy - m).astype(exp_dtype))                      # (TQ, Np)
    denom = jnp.sum(e.astype(jnp.float32), axis=-1, keepdims=True)   # (TQ, 1) f32
    recip = pl.reciprocal(denom, approx=approx_recip)                # (TQ, 1) f32

    attn_ref[...] = (e.astype(jnp.float32) * recip).astype(attn_ref.dtype)

    # out_tile = attention @ x^T  (canonical); normalization folded in afterwards.
    out_un = jnp.dot(e.astype(compute_dtype), xt_cd_ref[...],
                     preferred_element_type=jnp.float32)             # (TQ, Cp) f32

    gamma = gamma_ref[0, 0]
    out_ref[...] = gamma * (out_un * recip) + xt_res_ref[...]


def self_attn(x, wq, bq, wk, bk, gamma, *, tile_q=None,
              compute_dtype=jnp.bfloat16, approx_recip=True,
              attn_dtype=jnp.float32, exp_dtype=None):
    """x: (B, C, N). Returns (out (B, C, N) f32, attention (B, N, N) attn_dtype)."""
    B, C, N = x.shape

    # --- Generation-aware defaults (tile width, scoped-VMEM budget, exp dtype). ---
    kind = jax.devices()[0].device_kind.lower()
    if "v7" in kind:                       # 64 MiB VMEM, 256-wide MXU, 2 TCs
        default_tq, vmem_limit = 128, 48 * 1024 * 1024
    elif "v6" in kind:                     # 128 MiB VMEM, 256-wide MXU
        default_tq, vmem_limit = 256, 100 * 1024 * 1024
    elif "v5" in kind:                     # 128 MiB VMEM, 128-wide MXU
        default_tq, vmem_limit = 128, 100 * 1024 * 1024
    else:                                  # unknown chip: conservative defaults
        default_tq, vmem_limit = 128, None

    if tile_q is None:
        tile_q = default_tq
    # Lane-dense query tiles, never wider than the lane-rounded sequence length.
    tile_q = max(128, min(tile_q, pl.cdiv(N, 128) * 128))
    assert tile_q % 128 == 0

    if exp_dtype is None:
        bf16_eup = ("v6" in kind) or ("v7" in kind)   # v5e has no bf16 EUP path
        exp_dtype = compute_dtype if (compute_dtype != jnp.float32 and bf16_eup) \
            else jnp.float32

    hi = jax.lax.Precision.HIGHEST

    # --- Pad sequence dim to the query tile (lane-dense) and channels to sublanes. ---
    x = x.astype(jnp.float32)
    n_pad = pl.cdiv(N, tile_q) * tile_q
    c_pad = pl.cdiv(C, 8) * 8

    x_p = jnp.pad(x, ((0, 0), (0, c_pad - C), (0, n_pad - N)))
    wq_p = jnp.pad(wq.astype(jnp.float32), ((0, c_pad - C), (0, c_pad - C)))
    wk_p = jnp.pad(wk.astype(jnp.float32), ((0, c_pad - C), (0, c_pad - C)))
    bq_p = jnp.pad(bq.astype(jnp.float32), (0, c_pad - C))
    bk_p = jnp.pad(bk.astype(jnp.float32), (0, c_pad - C))

    # x^T in (N, C) layout: f32 copy only for the residual add (read per-tile),
    # compute-dtype copy (cast ONCE here) for both MXU matmuls.
    xt_res = jnp.transpose(x_p, (0, 2, 1))                          # (B, Np, Cp) f32
    xt_cd = xt_res.astype(compute_dtype)

    # K = Wk @ x + bk precomputed by XLA (O(B*C^2*N) — negligible vs. N^2 work).
    # This removes the per-batch scratch init and lets both grid axes be parallel.
    k = jnp.einsum("oc,bcn->bon", wk_p, x_p, precision=hi) + bk_p[None, :, None]
    k_cd = k.astype(compute_dtype)                                   # (B, Cp, Np)

    wqt_cd = jnp.transpose(wq_p).astype(compute_dtype)               # (Cp_in, Cp_out)
    bq_row = bq_p.reshape(1, c_pad)

    # Additive key-padding bias: 0 for valid keys, -1e30 for padded keys.
    key_bias = jnp.where(jnp.arange(n_pad)[None, :] < N,
                         jnp.float32(0.0), jnp.float32(-1e30))

    gamma2 = jnp.asarray(gamma, jnp.float32).reshape(1, 1)

    n_qt = n_pad // tile_q
    kernel = functools.partial(
        _self_attn_kernel, tile_q=tile_q, compute_dtype=compute_dtype,
        exp_dtype=exp_dtype, approx_recip=approx_recip)

    out_shapes = (
        jax.ShapeDtypeStruct((B, n_pad, c_pad), jnp.float32),        # out, (N, C) layout
        jax.ShapeDtypeStruct((B, n_pad, n_pad), attn_dtype),         # attention
    )

    grid_spec = pltpu.PrefetchScalarGridSpec(
        num_scalar_prefetch=0,
        grid=(B, n_qt),
        in_specs=[
            # x^T (compute dtype): full block, resident per batch (constant over qt).
            pl.BlockSpec((pl.Squeezed(), n_pad, c_pad), lambda b, qt: (b, 0, 0)),
            # x^T (f32): only this query tile, for the exact residual add.
            pl.BlockSpec((pl.Squeezed(), tile_q, c_pad), lambda b, qt: (b, qt, 0)),
            # K (compute dtype): resident per batch.
            pl.BlockSpec((pl.Squeezed(), c_pad, n_pad), lambda b, qt: (b, 0, 0)),
            pl.BlockSpec((c_pad, c_pad), lambda b, qt: (0, 0)),      # Wq^T
            pl.BlockSpec((1, c_pad), lambda b, qt: (0, 0)),          # bq
            pl.BlockSpec((1, n_pad), lambda b, qt: (0, 0)),          # key bias
            pl.BlockSpec((1, 1), lambda b, qt: (0, 0),
                         memory_space=pltpu.MemorySpace.SMEM),       # gamma
        ],
        out_specs=[
            pl.BlockSpec((pl.Squeezed(), tile_q, c_pad), lambda b, qt: (b, qt, 0)),
            # TODO(synk): on v5e, pipeline_mode=pl.Buffered(3) here can hide the
            # f32 attention writeback if profiling shows exposed DMA.
            pl.BlockSpec((pl.Squeezed(), tile_q, n_pad), lambda b, qt: (b, qt, 0)),
        ],
    )

    cd_bytes = jnp.finfo(compute_dtype).bits // 8
    attn_bytes = jnp.finfo(attn_dtype).bits // 8
    cost = pl.CostEstimate(
        flops=int(B * (2 * n_pad * c_pad * c_pad + 4 * c_pad * n_pad * n_pad)),
        transcendentals=int(B * n_pad * n_pad),
        bytes_accessed=int(B * (n_pad * c_pad * (2 * cd_bytes + 8)
                                + n_pad * n_pad * attn_bytes)
                           + c_pad * c_pad * cd_bytes),
    )

    out_p, attn_p = pl.pallas_call(
        kernel,
        out_shape=out_shapes,
        grid_spec=grid_spec,
        compiler_params=pltpu.CompilerParams(
            # No cross-step state -> both axes parallel (megacore / dual-TC).
            dimension_semantics=("parallel", "parallel"),
            vmem_limit_bytes=vmem_limit,
        ),
        cost_estimate=cost,
    )(xt_cd, xt_res, k_cd, wqt_cd, bq_row, key_bias, gamma2)

    # Back to channel-major; drop channel/sequence padding.
    out = jnp.transpose(out_p, (0, 2, 1))[:, :C, :N]
    attn = attn_p[:, :N, :N]
    return out, attn


def reference(x, wq, bq, wk, bk, gamma):
    # Pure-JAX reference matching the PyTorch forward exactly (f32 throughout).
    hi = jax.lax.Precision.HIGHEST
    q = jnp.einsum("oc,bcn->bon", wq, x, precision=hi) + bq[None, :, None]
    k = jnp.einsum("oc,bcn->bon", wk, x, precision=hi) + bk[None, :, None]
    energy = jnp.einsum("bcn,bcm->bnm", q, k, precision=hi)          # bmm(Q^T, K)
    attn = jax.nn.softmax(energy, axis=-1)
    out = jnp.einsum("bcn,bmn->bcm", x, attn, precision=hi)          # bmm(x, attn^T)
    out = gamma * out + x
    return out, attn


if __name__ == "__main__":
    B, C, N = 2, 4, 16   # small synthetic shapes consistent with (B x C x N) usage

    key = jax.random.PRNGKey(0)
    kx, kwq, kbq, kwk, kbk = jax.random.split(key, 5)

    x = jax.random.normal(kx, (B, C, N), dtype=jnp.float32)
    # Deterministic "PyTorch-like" init for 1x1 Conv1d weights/biases.
    bound = 1.0 / jnp.sqrt(jnp.float32(C))
    wq = jax.random.uniform(kwq, (C, C), jnp.float32, -bound, bound)
    bq = jax.random.uniform(kbq, (C,), jnp.float32, -bound, bound)
    wk = jax.random.uniform(kwk, (C, C), jnp.float32, -bound, bound)
    bk = jax.random.uniform(kbk, (C,), jnp.float32, -bound, bound)
    gamma = jnp.float32(1.0)   # nn.Parameter(torch.ones(1))

    out_ref_, attn_ref_ = reference(x, wq, bq, wk, bk, gamma)

    # 1) Exact path: f32 MXU operands, f32 exp, exact reciprocal -> tight tolerance.
    out32, attn32 = self_attn(x, wq, bq, wk, bk, gamma,
                              compute_dtype=jnp.float32, approx_recip=False)
    jax.block_until_ready((out32, attn32))
    assert jnp.allclose(out32, out_ref_, atol=1e-5, rtol=1e-5)
    assert jnp.allclose(attn32, attn_ref_, atol=1e-5, rtol=1e-5)

    # 2) Fast default path: bf16 MXU operands (f32 accumulate / f32 softmax stats,
    #    bf16 exp on v6e/v7x) + EUP approx reciprocal -> relaxed tolerance.
    out, attn = self_attn(x, wq, bq, wk, bk, gamma)
    jax.block_until_ready((out, attn))
    assert jnp.allclose(out, out_ref_, atol=2e-2, rtol=2e-2)
    assert jnp.allclose(attn, attn_ref_, atol=2e-2, rtol=2e-2)

    print("KERNEL_OK")
</pallas_src>

<mosaic_0001>
module attributes {stable_mosaic.version = 11 : i64} {
  func.func @_self_attn_kernel(%arg0: i32, %arg1: i32, %arg2: memref<1x128x8xf32, #tpu.memory_space<vmem>>, %arg3: memref<1x128x8xf32, #tpu.memory_space<vmem>>, %arg4: memref<1x8x128xf32, #tpu.memory_space<vmem>>, %arg5: memref<8x8xf32, #tpu.memory_space<vmem>>, %arg6: memref<1x8xf32, #tpu.memory_space<vmem>>, %arg7: memref<1x128xf32, #tpu.memory_space<vmem>>, %arg8: memref<1x1xf32, #tpu.memory_space<smem>>, %arg9: memref<1x128x8xf32, #tpu.memory_space<vmem>>, %arg10: memref<1x128x128xf32, #tpu.memory_space<vmem>>) attributes {dimension_semantics = [#tpu.dimension_semantics<parallel>, #tpu.dimension_semantics<parallel>], iteration_bounds = array<i64: 2, 1>, scalar_prefetch = 0 : i64, scratch_operands = 0 : i64, tpu.core_type = #tpu.core_type<tc>, window_params = [{transform_indices = @transform_0, window_bounds = array<i64: 1, 128, 8>}, {transform_indices = @transform_1, window_bounds = array<i64: 1, 128, 8>}, {transform_indices = @transform_2, window_bounds = array<i64: 1, 8, 128>}, {pipeline_mode = #tpu.pipeline_mode<synchronous>, transform_indices = @transform_3, window_bounds = array<i64: 8, 8>}, {pipeline_mode = #tpu.pipeline_mode<synchronous>, transform_indices = @transform_4, window_bounds = array<i64: 1, 8>}, {pipeline_mode = #tpu.pipeline_mode<synchronous>, transform_indices = @transform_5, window_bounds = array<i64: 1, 128>}, {transform_indices = @transform_6, window_bounds = array<i64: 1, 1>}, {transform_indices = @transform_7, window_bounds = array<i64: 1, 128, 8>}, {transform_indices = @transform_8, window_bounds = array<i64: 1, 128, 128>}]} {
    %c128_i32 = arith.constant 128 : i32
    %0 = arith.muli %arg1, %c128_i32 : i32
    %1 = tpu.assume_multiple %0, 128 : i32
    %c0 = arith.constant 0 : index
    %2 = arith.index_cast %1 : i32 to index
    %c0_0 = arith.constant 0 : index
    %3 = vector.load %arg2[%c0, %2, %c0_0] : memref<1x128x8xf32, #tpu.memory_space<vmem>>, vector<1x128x8xf32>
    %4 = vector.shape_cast %3 : vector<1x128x8xf32> to vector<128x8xf32>
    %c0_1 = arith.constant 0 : index
    %c0_2 = arith.constant 0 : index
    %5 = vector.load %arg5[%c0_1, %c0_2] : memref<8x8xf32, #tpu.memory_space<vmem>>, vector<8x8xf32>
    %cst = arith.constant dense<0.000000e+00> : vector<128x8xf32>
    %6 = tpu.matmul %4, %5, %cst {dimension_numbers = #tpu.dot_dimension_numbers<[1], [0], [0], [1], [0, 0, 1, 1], [], []>} : vector<128x8xf32>, vector<8x8xf32>, vector<128x8xf32> -> vector<128x8xf32>
    %c0_3 = arith.constant 0 : index
    %c0_4 = arith.constant 0 : index
    %7 = vector.load %arg6[%c0_3, %c0_4] : memref<1x8xf32, #tpu.memory_space<vmem>>, vector<1x8xf32>
    %8 = vector.broadcast %7 : vector<1x8xf32> to vector<128x8xf32>
    %9 = arith.addf %6, %8 : vector<128x8xf32>
    %c0_5 = arith.constant 0 : index
    %c0_6 = arith.constant 0 : index
    %c0_7 = arith.constant 0 : index
    %10 = vector.load %arg4[%c0_5, %c0_6, %c0_7] : memref<1x8x128xf32, #tpu.memory_space<vmem>>, vector<1x8x128xf32>
    %11 = vector.shape_cast %10 : vector<1x8x128xf32> to vector<8x128xf32>
    %cst_8 = arith.constant dense<0.000000e+00> : vector<128x128xf32>
    %12 = tpu.matmul %9, %11, %cst_8 {dimension_numbers = #tpu.dot_dimension_numbers<[1], [0], [0], [1], [0, 0, 1, 1], [], []>} : vector<128x8xf32>, vector<8x128xf32>, vector<128x128xf32> -> vector<128x128xf32>
    %c0_9 = arith.constant 0 : index
    %c0_10 = arith.constant 0 : index
    %13 = vector.load %arg7[%c0_9, %c0_10] : memref<1x128xf32, #tpu.memory_space<vmem>>, vector<1x128xf32>
    %14 = vector.broadcast %13 : vector<1x128xf32> to vector<128x128xf32>
    %15 = arith.addf %12, %14 : vector<128x128xf32>
    %cst_11 = arith.constant dense<0xFF800000> : vector<128xf32>
    %16 = vector.multi_reduction <maximumf>, %15, %cst_11 [1] : vector<128x128xf32> to vector<128xf32>
    %17 = vector.shape_cast %16 : vector<128xf32> to vector<128x1xf32>
    %18 = vector.broadcast %17 : vector<128x1xf32> to vector<128x128xf32>
    %19 = arith.subf %15, %18 : vector<128x128xf32>
    %20 = math.exp %19 : vector<128x128xf32>
    %cst_12 = arith.constant dense<0.000000e+00> : vector<128xf32>
    %21 = vector.multi_reduction <add>, %20, %cst_12 [1] : vector<128x128xf32> to vector<128xf32>
    %22 = vector.shape_cast %21 : vector<128xf32> to vector<128x1xf32>
    %23 = tpu.reciprocal %22 : vector<128x1xf32> -> vector<128x1xf32>
    %24 = vector.broadcast %23 : vector<128x1xf32> to vector<128x128xf32>
    %25 = arith.mulf %20, %24 : vector<128x128xf32>
    %c0_13 = arith.constant 0 : index
    %c0_14 = arith.constant 0 : index
    %c0_15 = arith.constant 0 : index
    %26 = vector.load %arg10[%c0_13, %c0_14, %c0_15] : memref<1x128x128xf32, #tpu.memory_space<vmem>>, vector<1x128x128xf32>
    %27 = vector.shape_cast %26 : vector<1x128x128xf32> to vector<128x128xf32>
    %28 = vector.shape_cast %25 : vector<128x128xf32> to vector<1x128x128xf32>
    tpu.vector_store %arg10[%c0_13, %c0_14, %c0_15], %28 {strides = array<i32>} : memref<1x128x128xf32, #tpu.memory_space<vmem>>, vector<1x128x128xf32>,
    %c0_16 = arith.constant 0 : index
    %c0_17 = arith.constant 0 : index
    %c0_18 = arith.constant 0 : index
    %29 = vector.load %arg2[%c0_16, %c0_17, %c0_18] : memref<1x128x8xf32, #tpu.memory_space<vmem>>, vector<1x128x8xf32>
    %30 = vector.shape_cast %29 : vector<1x128x8xf32> to vector<128x8xf32>
    %cst_19 = arith.constant dense<0.000000e+00> : vector<128x8xf32>
    %31 = tpu.matmul %20, %30, %cst_19 {dimension_numbers = #tpu.dot_dimension_numbers<[1], [0], [0], [1], [0, 0, 1, 1], [], []>} : vector<128x128xf32>, vector<128x8xf32>, vector<128x8xf32> -> vector<128x8xf32>
    %c0_20 = arith.constant 0 : index
    %c0_21 = arith.constant 0 : index
    %32 = memref.load %arg8[%c0_20, %c0_21] : memref<1x1xf32, #tpu.memory_space<smem>>
    %33 = vector.broadcast %23 : vector<128x1xf32> to vector<128x8xf32>
    %34 = arith.mulf %31, %33 : vector<128x8xf32>
    %35 = vector.broadcast %32 : f32 to vector<128x8xf32>
    %36 = arith.mulf %35, %34 : vector<128x8xf32>
    %c0_22 = arith.constant 0 : index
    %c0_23 = arith.constant 0 : index
    %c0_24 = arith.constant 0 : index
    %37 = vector.load %arg3[%c0_22, %c0_23, %c0_24] : memref<1x128x8xf32, #tpu.memory_space<vmem>>, vector<1x128x8xf32>
    %38 = vector.shape_cast %37 : vector<1x128x8xf32> to vector<128x8xf32>
    %39 = arith.addf %36, %38 : vector<128x8xf32>
    %c0_25 = arith.constant 0 : index
    %c0_26 = arith.constant 0 : index
    %c0_27 = arith.constant 0 : index
    %40 = vector.load %arg9[%c0_25, %c0_26, %c0_27] : memref<1x128x8xf32, #tpu.memory_space<vmem>>, vector<1x128x8xf32>
    %41 = vector.shape_cast %40 : vector<1x128x8xf32> to vector<128x8xf32>
    %42 = vector.shape_cast %39 : vector<128x8xf32> to vector<1x128x8xf32>
    tpu.vector_store %arg9[%c0_25, %c0_26, %c0_27], %42 {strides = array<i32>} : memref<1x128x8xf32, #tpu.memory_space<vmem>>, vector<1x128x8xf32>,
    return
  }
  func.func @transform_0(%arg0: i32, %arg1: i32) -> (i32, i32, i32) {
    %c0_i32 = arith.constant 0 : i32
    %c0_i32_0 = arith.constant 0 : i32
    %c0_i32_1 = arith.constant 0 : i32
    return %arg0, %c0_i32, %c0_i32_0 : i32, i32, i32
  }
  func.func @transform_1(%arg0: i32, %arg1: i32) -> (i32, i32, i32) {
    %c0_i32 = arith.constant 0 : i32
    %c0_i32_0 = arith.constant 0 : i32
    return %arg0, %arg1, %c0_i32 : i32, i32, i32
  }
  func.func @transform_2(%arg0: i32, %arg1: i32) -> (i32, i32, i32) {
    %c0_i32 = arith.constant 0 : i32
    %c0_i32_0 = arith.constant 0 : i32
    %c0_i32_1 = arith.constant 0 : i32
    return %arg0, %c0_i32, %c0_i32_0 : i32, i32, i32
  }
  func.func @transform_3(%arg0: i32, %arg1: i32) -> (i32, i32) {
    %c0_i32 = arith.constant 0 : i32
    %c0_i32_0 = arith.constant 0 : i32
    %c0_i32_1 = arith.constant 0 : i32
    return %c0_i32, %c0_i32_0 : i32, i32
  }
  func.func @transform_4(%arg0: i32, %arg1: i32) -> (i32, i32) {
    %c0_i32 = arith.constant 0 : i32
    %c0_i32_0 = arith.constant 0 : i32
    %c0_i32_1 = arith.constant 0 : i32
    return %c0_i32, %c0_i32_0 : i32, i32
  }
  func.func @transform_5(%arg0: i32, %arg1: i32) -> (i32, i32) {
    %c0_i32 = arith.constant 0 : i32
    %c0_i32_0 = arith.constant 0 : i32
    %c0_i32_1 = arith.constant 0 : i32
    return %c0_i32, %c0_i32_0 : i32, i32
  }
  func.func @transform_6(%arg0: i32, %arg1: i32) -> (i32, i32) {
    %c0_i32 = arith.constant 0 : i32
    %c0_i32_0 = arith.constant 0 : i32
    %c0_i32_1 = arith.constant 0 : i32
    return %c0_i32, %c0_i32_0 : i32, i32
  }
  func.func @transform_7(%arg0: i32, %arg1: i32) -> (i32, i32, i32) {
    %c0_i32 = arith.constant 0 : i32
    %c0_i32_0 = arith.constant 0 : i32
    return %arg0, %arg1, %c0_i32 : i32, i32, i32
  }
  func.func @transform_8(%arg0: i32, %arg1: i32) -> (i32, i32, i32) {
    %c0_i32 = arith.constant 0 : i32
    %c0_i32_0 = arith.constant 0 : i32
    return %arg0, %arg1, %c0_i32 : i32, i32, i32
  }
}

</mosaic_0001>

<llo_original>
// kernel: tpu_custom_call.1
$region0: #{tpu_custom_call.1}
  #allocation0 [shape = 'u32[]', space=smem, size = 0x4, offset = 0x4, fixed_abs, tag = 'smem constant byte address 0x4 - core index']
  #allocation1 [shape = 'u32[144,128]{1,0:T(1,128)}', space=vmem, size = 0x12000, scoped, tag = 'internal scratch']
  #allocation2 [shape = 'f32[1,1]{1,0:T(1,128)S(6)}', space=smem, size = 0x200, scoped, tag = 'scoped memory for tpu_custom_call.1']
  %s0 = inlined_call_operand.vmem [shape: f32[2,128,8], index: 0, kind: input, shape index: {}]
  %s1 = inlined_call_operand.vmem [shape: f32[2,128,8], index: 1, kind: input, shape index: {}]
  %s2 = inlined_call_operand.vmem [shape: f32[2,8,128], index: 2, kind: input, shape index: {}]
  %s3 = inlined_call_operand.vmem [shape: f32[8,8], index: 3, kind: input, shape index: {}]
  %s4 = inlined_call_operand.vmem [shape: f32[1,8], index: 4, kind: input, shape index: {}]
  %s5 = inlined_call_operand.vmem [shape: f32[1,128], index: 5, kind: input, shape index: {}]
  %s6 = inlined_call_operand.<no memory space> [shape: f32[1,1], index: 6, kind: input, shape index: {}]
  %s7 = inlined_call_operand.vmem [shape: f32[2,128,8], index: 7, kind: output, shape index: {0}]
  %s8 = inlined_call_operand.hbm [shape: f32[2,128,128], index: 8, kind: output, shape index: {1}]
  %9 = xla_tuple %s7, %s8
  %s10 = sld [smem:[#allocation0]]
  $region69: #{tpu_custom_call.1} parent=0
    _
  %s12 = ssub.s32 1, %s10
  %s13 = scalar_select 0, %s12, %s10
  %14 = sst [smem:[#allocation2]] %s6
  $region1: #{tpu_custom_call.1} parent=0
    #allocation3 [shape = 'u8[131072]{0}', space=vmem, size = 0x20000, scoped, tag = 'output window, operand 1']
    #allocation4 [shape = 's32[2]{0}', space=sflag, size = 0x8, scoped, tag = 'scoped memory for tpu_custom_call.1']
    %15 = vsyncpa [#allocation4], 0
    %s16 = scalar_lea.sflag [#allocation4], 1
    %17 = vsyncpa %s16, 0
    loop: start=0, step=1, limit=4
    $region2: #{tpu_custom_call.1} parent=1 // loop_pre_header
      _
    $region3: #{tpu_custom_call.1} parent=1 // loop_header
      %s19 = sphi 0, %s23
      %p20 = scmp.ge.s32.totalorder %s19, 4
      %s26 = sphi 0, %s38
      %s27 = sphi 0, %s34
      %s28 = sphi 0, %s26
      %s29 = sphi 0, %s27
      %s30 = sphi 0, %s28
      %s31 = sphi 0, %s29
      %s41 = sphi 0, %s43
      %s44 = sphi 0, %s41
      %s45 = sphi 0, %s44
      %s61 = sphi 0, %s45
      %s69 = sphi 0, %s71
      %s72 = sphi 0, %s69
      %s73 = sphi 0, %s72
      %s89 = sphi 0, %s73
      %s95 = sphi 0, %s97
      %s98 = sphi 0, %s95
      %s99 = sphi 0, %s98
      %s115 = sphi 0, %s99
      %s119 = sphi 0, %s119
      %s121 = sphi 0, %s119
      %s122 = sphi 0, %s121
      %s136 = sphi 0, %s122
      %s140 = sphi 0, %s140
      %s142 = sphi 0, %s140
      %s143 = sphi 0, %s142
      %s157 = sphi 0, %s143
      %s161 = sphi 0, %s161
      %s163 = sphi 0, %s161
      %s164 = sphi 0, %s163
      %s178 = sphi 0, %s164
      %s182 = sphi 0, %s182
      %s184 = sphi 0, %s182
      %s185 = sphi 0, %s184
      %s199 = sphi 0, %s185
      %s207 = sphi 0, %s209
      %s210 = sphi 0, %s207
      %s211 = sphi 0, %s210
      %s227 = sphi 0, %s211
      %s235 = sphi 0, %s237
      %s238 = sphi 0, %s235
      %s239 = sphi 0, %s238
      %s255 = sphi 0, %s239
    $region4: #{tpu_custom_call.1} parent=1 // loop_header_branch
      %22 = sbr.rel (%p20) target = $region8
    $region5: #{tpu_custom_call.1} parent=1 // loop_body
      %s24 = ssub.s32 %s19, 1
      %s25 = ssub.s32 %s19, 2
      %s32 = sadd.s32 1, %s27
      %p33 = scmp.ge.s32.totalorder %s32, 1
      %s34 = scalar_select %p33, 0, %s32
      %s35 = sadd.s32 1, %s26
      %s36 = scalar_select %p33, %s35, %s26
      %p37 = scmp.ge.s32.totalorder %s36, 2
      %s38 = scalar_select %p37, 0, %s36
      %s39 = ssub.s32 %s26, %s38
      %p40 = scmp.eq.s32.totalorder %s39, 0
      %s42 = sadd.s32 %s41, 1
      %s43 = scalar_select %p40, %s41, %s42
      %p46 = pneg %p40
      %p47 = scmp.eq.s32.totalorder %s19, 1
      %p48 = por %p46, %p47
      %p49 = scmp.ne.s32.totalorder %s41, %s44
      %p50 = scmp.eq.s32.totalorder %s19, 0
      %p51 = por %p49, %p50
      %p52 = scmp.ne.s32.totalorder %s41, %s44
      %p53 = scmp.eq.s32.totalorder %s24, 1
      %p54 = por %p52, %p53
      %p55 = scmp.ne.s32.totalorder %s44, %s45
      %p56 = scmp.eq.s32.totalorder %s24, 0
      %p57 = por %p55, %p56
      %p58 = scmp.ne.s32.totalorder %s44, %s45
      %p59 = scmp.eq.s32.totalorder %s25, 1
      %p60 = por %p58, %p59
      %p62 = scmp.ne.s32.totalorder %s45, %s61
      %p63 = scmp.eq.s32.totalorder %s25, 0
      %p64 = por %p62, %p63
      %s65 = ssub.s32 %s26, %s38
      %s66 = ssub.s32 %s27, %s34
      %s67 = sor.u32 %s65, %s66
      %p68 = scmp.eq.s32.totalorder %s67, 0
      %s70 = sadd.s32 %s69, 1
      %s71 = scalar_select %p68, %s69, %s70
      %p74 = pneg %p68
      %p75 = scmp.eq.s32.totalorder %s19, 1
      %p76 = por %p74, %p75
      %p77 = scmp.ne.s32.totalorder %s69, %s72
      %p78 = scmp.eq.s32.totalorder %s19, 0
      %p79 = por %p77, %p78
      %p80 = scmp.ne.s32.totalorder %s69, %s72
      %p81 = scmp.eq.s32.totalorder %s24, 1
      %p82 = por %p80, %p81
      %p83 = scmp.ne.s32.totalorder %s72, %s73
      %p84 = scmp.eq.s32.totalorder %s24, 0
      %p85 = por %p83, %p84
      %p86 = scmp.ne.s32.totalorder %s72, %s73
      %p87 = scmp.eq.s32.totalorder %s25, 1
      %p88 = por %p86, %p87
      %p90 = scmp.ne.s32.totalorder %s73, %s89
      %p91 = scmp.eq.s32.totalorder %s25, 0
      %p92 = por %p90, %p91
      %s93 = ssub.s32 %s26, %s38
      %p94 = scmp.eq.s32.totalorder %s93, 0
      %s96 = sadd.s32 %s95, 1
      %s97 = scalar_select %p94, %s95, %s96
      %p100 = pneg %p94
      %p101 = scmp.eq.s32.totalorder %s19, 1
      %p102 = por %p100, %p101
      %p103 = scmp.ne.s32.totalorder %s95, %s98
      %p104 = scmp.eq.s32.totalorder %s19, 0
      %p105 = por %p103, %p104
      %p106 = scmp.ne.s32.totalorder %s95, %s98
      %p107 = scmp.eq.s32.totalorder %s24, 1
      %p108 = por %p106, %p107
      %p109 = scmp.ne.s32.totalorder %s98, %s99
      %p110 = scmp.eq.s32.totalorder %s24, 0
      %p111 = por %p109, %p110
      %p112 = scmp.ne.s32.totalorder %s98, %s99
      %p113 = scmp.eq.s32.totalorder %s25, 1
      %p114 = por %p112, %p113
      %p116 = scmp.ne.s32.totalorder %s99, %s115
      %p117 = scmp.eq.s32.totalorder %s25, 0
      %p118 = por %p116, %p117
      %s120 = sadd.s32 %s119, 1
      %p123 = scmp.eq.s32.totalorder %s19, 1
      %p124 = scmp.ne.s32.totalorder %s119, %s121
      %p125 = scmp.eq.s32.totalorder %s19, 0
      %p126 = por %p124, %p125
      %p127 = scmp.ne.s32.totalorder %s119, %s121
      %p128 = scmp.eq.s32.totalorder %s24, 1
      %p129 = por %p127, %p128
      %p130 = scmp.ne.s32.totalorder %s121, %s122
      %p131 = scmp.eq.s32.totalorder %s24, 0
      %p132 = por %p130, %p131
      %p133 = scmp.ne.s32.totalorder %s121, %s122
      %p134 = scmp.eq.s32.totalorder %s25, 1
      %p135 = por %p133, %p134
      %p137 = scmp.ne.s32.totalorder %s122, %s136
      %p138 = scmp.eq.s32.totalorder %s25, 0
      %p139 = por %p137, %p138
      %s141 = sadd.s32 %s140, 1
      %p144 = scmp.eq.s32.totalorder %s19, 1
      %p145 = scmp.ne.s32.totalorder %s140, %s142
      %p146 = scmp.eq.s32.totalorder %s19, 0
      %p147 = por %p145, %p146
      %p148 = scmp.ne.s32.totalorder %s140, %s142
      %p149 = scmp.eq.s32.totalorder %s24, 1
      %p150 = por %p148, %p149
      %p151 = scmp.ne.s32.totalorder %s142, %s143
      %p152 = scmp.eq.s32.totalorder %s24, 0
      %p153 = por %p151, %p152
      %p154 = scmp.ne.s32.totalorder %s142, %s143
      %p155 = scmp.eq.s32.totalorder %s25, 1
      %p156 = por %p154, %p155
      %p158 = scmp.ne.s32.totalorder %s143, %s157
      %p159 = scmp.eq.s32.totalorder %s25, 0
      %p160 = por %p158, %p159
      %s162 = sadd.s32 %s161, 1
      %p165 = scmp.eq.s32.totalorder %s19, 1
      %p166 = scmp.ne.s32.totalorder %s161, %s163
      %p167 = scmp.eq.s32.totalorder %s19, 0
      %p168 = por %p166, %p167
      %p169 = scmp.ne.s32.totalorder %s161, %s163
      %p170 = scmp.eq.s32.totalorder %s24, 1
      %p171 = por %p169, %p170
      %p172 = scmp.ne.s32.totalorder %s163, %s164
      %p173 = scmp.eq.s32.totalorder %s24, 0
      %p174 = por %p172, %p173
      %p175 = scmp.ne.s32.totalorder %s163, %s164
      %p176 = scmp.eq.s32.totalorder %s25, 1
      %p177 = por %p175, %p176
      %p179 = scmp.ne.s32.totalorder %s164, %s178
      %p180 = scmp.eq.s32.totalorder %s25, 0
      %p181 = por %p179, %p180
      %s183 = sadd.s32 %s182, 1
      %p186 = scmp.eq.s32.totalorder %s19, 1
      %p187 = scmp.ne.s32.totalorder %s182, %s184
      %p188 = scmp.eq.s32.totalorder %s19, 0
      %p189 = por %p187, %p188
      %p190 = scmp.ne.s32.totalorder %s182, %s184
      %p191 = scmp.eq.s32.totalorder %s24, 1
      %p192 = por %p190, %p191
      %p193 = scmp.ne.s32.totalorder %s184, %s185
      %p194 = scmp.eq.s32.totalorder %s24, 0
      %p195 = por %p193, %p194
      %p196 = scmp.ne.s32.totalorder %s184, %s185
      %p197 = scmp.eq.s32.totalorder %s25, 1
      %p198 = por %p196, %p197
      %p200 = scmp.ne.s32.totalorder %s185, %s199
      %p201 = scmp.eq.s32.totalorder %s25, 0
      %p202 = por %p200, %p201
      %s203 = ssub.s32 %s26, %s38
      %s204 = ssub.s32 %s27, %s34
      %s205 = sor.u32 %s203, %s204
      %p206 = scmp.eq.s32.totalorder %s205, 0
      %s208 = sadd.s32 %s207, 1
      %s209 = scalar_select %p206, %s207, %s208
      %p212 = pneg %p206
      %p213 = scmp.eq.s32.totalorder %s19, 1
      %p214 = por %p212, %p213
      %p215 = scmp.ne.s32.totalorder %s207, %s210
      %p216 = scmp.eq.s32.totalorder %s19, 0
      %p217 = por %p215, %p216
      %p218 = scmp.ne.s32.totalorder %s207, %s210
      %p219 = scmp.eq.s32.totalorder %s24, 1
      %p220 = por %p218, %p219
      %p221 = scmp.ne.s32.totalorder %s210, %s211
      %p222 = scmp.eq.s32.totalorder %s24, 0
      %p223 = por %p221, %p222
      %p224 = scmp.ne.s32.totalorder %s210, %s211
      %p225 = scmp.eq.s32.totalorder %s25, 1
      %p226 = por %p224, %p225
      %p228 = scmp.ne.s32.totalorder %s211, %s227
      %p229 = scmp.eq.s32.totalorder %s25, 0
      %p230 = por %p228, %p229
      %s231 = ssub.s32 %s26, %s38
      %s232 = ssub.s32 %s27, %s34
      %s233 = sor.u32 %s231, %s232
      %p234 = scmp.eq.s32.totalorder %s233, 0
      %s236 = sadd.s32 %s235, 1
      %s237 = scalar_select %p234, %s235, %s236
      %p240 = pneg %p234
      %p241 = scmp.eq.s32.totalorder %s19, 1
      %p242 = por %p240, %p241
      %p243 = scmp.ne.s32.totalorder %s235, %s238
      %p244 = scmp.eq.s32.totalorder %s19, 0
      %p245 = por %p243, %p244
      %p246 = scmp.ne.s32.totalorder %s235, %s238
      %p247 = scmp.eq.s32.totalorder %s24, 1
      %p248 = por %p246, %p247
      %p249 = scmp.ne.s32.totalorder %s238, %s239
      %p250 = scmp.eq.s32.totalorder %s24, 0
      %p251 = por %p249, %p250
      %p252 = scmp.ne.s32.totalorder %s238, %s239
      %p253 = scmp.eq.s32.totalorder %s25, 1
      %p254 = por %p252, %p253
      %p256 = scmp.ne.s32.totalorder %s239, %s255
      %p257 = scmp.eq.s32.totalorder %s25, 0
      %p258 = por %p256, %p257
      %p259 = scmp.le.s32.totalorder 1, %s19
      %p260 = scmp.lt.s32.totalorder %s19, 3
      %p261 = pnand %p259, %p260
      %p262 = pneg %p261
      // Predicated region
      $region9: #{tpu_custom_call.1} parent=5 // pred_check
        _
      $region10: #{tpu_custom_call.1} parent=5 // pred_check_branch
        %264 = sbr.rel (%p261) target = $region12
      $region11: #{tpu_custom_call.1} parent=5 // pred_region
        %s265 = ssub.s32 %s19, 1
        // Predicated region
        $region13: #{tpu_custom_call.1} parent=11 // pred_check
          %p266 = pneg %p132
        $region14: #{tpu_custom_call.1} parent=11 // pred_check_branch
          %268 = sbr.rel (%p266) target = $region16
        $region15: #{tpu_custom_call.1} parent=11 // pred_region
          _
        $region16: #{tpu_custom_call.1} parent=11 // pred_fallthru
          _
        // Predicated region
        $region17: #{tpu_custom_call.1} parent=11 // pred_check
          %p269 = pneg %p153
        $region18: #{tpu_custom_call.1} parent=11 // pred_check_branch
          %271 = sbr.rel (%p269) target = $region20
        $region19: #{tpu_custom_call.1} parent=11 // pred_region
          _
        $region20: #{tpu_custom_call.1} parent=11 // pred_fallthru
          _
        // Predicated region
        $region21: #{tpu_custom_call.1} parent=11 // pred_check
          %p272 = pneg %p174
        $region22: #{tpu_custom_call.1} parent=11 // pred_check_branch
          %274 = sbr.rel (%p272) target = $region24
        $region23: #{tpu_custom_call.1} parent=11 // pred_region
          _
        $region24: #{tpu_custom_call.1} parent=11 // pred_fallthru
          _
        // Predicated region
        $region25: #{tpu_custom_call.1} parent=11 // pred_check
          %p275 = pneg %p195
        $region26: #{tpu_custom_call.1} parent=11 // pred_check_branch
          %277 = sbr.rel (%p275) target = $region28
        $region27: #{tpu_custom_call.1} parent=11 // pred_region
          _
        $region28: #{tpu_custom_call.1} parent=11 // pred_fallthru
          _
      $region12: #{tpu_custom_call.1} parent=5 // pred_fallthru
        _
      %p278 = scmp.lt.s32.totalorder %s19, 2
      // Predicated region
      $region29: #{tpu_custom_call.1} parent=5 // pred_check
        %p279 = pneg %p278
      $region30: #{tpu_custom_call.1} parent=5 // pred_check_branch
        %281 = sbr.rel (%p279) target = $region32
      $region31: #{tpu_custom_call.1} parent=5 // pred_region
        // Predicated region
        $region33: #{tpu_custom_call.1} parent=31 // pred_check
          %p282 = pneg %p51
        $region34: #{tpu_custom_call.1} parent=31 // pred_check_branch
          %284 = sbr.rel (%p282) target = $region36
        $region35: #{tpu_custom_call.1} parent=31 // pred_region
          %p285 = scmp.lt.s32.totalorder %s26, 1
          %s286 = scalar_select %p285, %s26, 1
          %s287 = smul.addr %s286, 16
          %s288 = smul.addr %s287, 8
          %s289 = scalar_lea.vmem %s0, %s288
        $region36: #{tpu_custom_call.1} parent=31 // pred_fallthru
          _
        // Predicated region
        $region37: #{tpu_custom_call.1} parent=31 // pred_check
          %p290 = pneg %p79
        $region38: #{tpu_custom_call.1} parent=31 // pred_check_branch
          %292 = sbr.rel (%p290) target = $region40
        $region39: #{tpu_custom_call.1} parent=31 // pred_region
          %s293 = smul.u32 16, %s27
          %p294 = scmp.lt.s32.totalorder %s26, 1
          %s295 = scalar_select %p294, %s26, 1
          %p296 = scmp.lt.s32.totalorder %s293, 15
          %s297 = scalar_select %p296, %s293, 15
          %s298 = smul.addr %s295, 16
          %s299 = sadd.s32 %s297, %s298
          %s300 = smul.addr %s299, 8
          %s301 = scalar_lea.vmem %s1, %s300
          %s302 = smul.u32 16, %s27
        $region40: #{tpu_custom_call.1} parent=31 // pred_fallthru
          _
        // Predicated region
        $region41: #{tpu_custom_call.1} parent=31 // pred_check
          %p303 = pneg %p105
        $region42: #{tpu_custom_call.1} parent=31 // pred_check_branch
          %305 = sbr.rel (%p303) target = $region44
        $region43: #{tpu_custom_call.1} parent=31 // pred_region
          %p306 = scmp.lt.s32.totalorder %s26, 1
          %s307 = scalar_select %p306, %s26, 1
          %s308 = smul.addr %s307, 8
          %s309 = scalar_lea.vmem %s2, %s308
        $region44: #{tpu_custom_call.1} parent=31 // pred_fallthru
          _
      $region32: #{tpu_custom_call.1} parent=5 // pred_fallthru
        _
      %p310 = scmp.le.s32.totalorder 1, %s19
      %p311 = scmp.lt.s32.totalorder %s19, 3
      %p312 = pnand %p310, %p311
      %p313 = pneg %p312
      // Predicated region
      $region45: #{tpu_custom_call.1} parent=5 // pred_check
        _
      $region46: #{tpu_custom_call.1} parent=5 // pred_check_branch
        %315 = sbr.rel (%p312) target = $region48
      $region47: #{tpu_custom_call.1} parent=5 // pred_region
        %s316 = ssub.s32 %s19, 1
        %p317 = scmp.lt.s32.totalorder %s28, 1
        %s318 = scalar_select %p317, %s28, 1
        %s319 = smul.addr %s318, 16
        %s320 = smul.addr %s319, 8
        %s321 = scalar_lea.vmem %s0, %s320
        %p322 = pneg %p57
        %p323 = pneg %p54
        %s324 = smul.u32 16, %s29
        %p325 = scmp.lt.s32.totalorder %s28, 1
        %s326 = scalar_select %p325, %s28, 1
        %p327 = scmp.lt.s32.totalorder %s324, 15
        %s328 = scalar_select %p327, %s324, 15
        %s329 = smul.addr %s326, 16
        %s330 = sadd.s32 %s328, %s329
        %s331 = smul.addr %s330, 8
        %s332 = scalar_lea.vmem %s1, %s331
        %p333 = pneg %p85
        %p334 = pneg %p82
        %p335 = scmp.lt.s32.totalorder %s28, 1
        %s336 = scalar_select %p335, %s28, 1
        %s337 = smul.addr %s336, 8
        %s338 = scalar_lea.vmem %s2, %s337
        %p339 = pneg %p111
        %p340 = pneg %p108
        %p341 = pneg %p132
        %p342 = pneg %p129
        %p343 = pneg %p153
        %p344 = pneg %p150
        %p345 = pneg %p174
        %p346 = pneg %p171
        %p347 = pneg %p195
        %p348 = pneg %p192
        %p349 = pneg %p223
        %p350 = pneg %p220
        %s351 = smul.u32 16, %s29
        %p352 = scmp.lt.s32.totalorder %s28, 1
        %s353 = scalar_select %p352, %s28, 1
        %p354 = scmp.lt.s32.totalorder %s351, 15
        %s355 = scalar_select %p354, %s351, 15
        %s356 = smul.addr %s353, 16
        %s357 = sadd.s32 %s355, %s356
        %s358 = smul.addr %s357, 8
        %s359 = scalar_lea.vmem %s7, %s358
        %p360 = pneg %p251
        %p361 = pneg %p248
        %s362 = sand.u32 %s238, 1
        %s363 = scalar_lea.sflag [#allocation4], %s362
        %s364 = sand.u32 %s238, 1
        %s365 = smul.addr %s364, 128
        %s366 = scalar_lea.vmem [#allocation3], %s365
        %p367 = scmp.lt.s32.totalorder %s28, 1
        %s368 = scalar_select %p367, %s28, 1
        %s369 = smul.addr %s368, 16
        %s370 = smul.addr %s369, 8
        %s371 = scalar_lea.vmem %s0, %s370
        %s372 = smul.u32 16, %s29
        %p373 = scmp.lt.s32.totalorder %s28, 1
        %s374 = scalar_select %p373, %s28, 1
        %p375 = scmp.lt.s32.totalorder %s372, 15
        %s376 = scalar_select %p375, %s372, 15
        %s377 = smul.addr %s374, 16
        %s378 = sadd.s32 %s376, %s377
        %s379 = smul.addr %s378, 8
        %s380 = scalar_lea.vmem %s1, %s379
        %s381 = smul.u32 16, %s29
        %p382 = scmp.lt.s32.totalorder %s28, 1
        %s383 = scalar_select %p382, %s28, 1
        %s384 = smul.addr %s383, 8
        %s385 = scalar_lea.vmem %s2, %s384
        %s386 = smul.u32 16, %s29
        %p387 = scmp.lt.s32.totalorder %s28, 1
        %s388 = scalar_select %p387, %s28, 1
        %p389 = scmp.lt.s32.totalorder %s386, 15
        %s390 = scalar_select %p389, %s386, 15
        %s391 = smul.addr %s388, 16
        %s392 = sadd.s32 %s390, %s391
        %s393 = smul.addr %s392, 8
        %s394 = scalar_lea.vmem %s7, %s393
        %s395 = smul.u32 16, %s29
        %s396 = smul.u32 16, %s29
        %s397 = smul.u32 %s29, 128
        %s398 = scalar_lea.vmem %s371, %s397
        %v399 = vld [vmem:[%s398] sm:$0xff]
        %v400 = vld [vmem:[%s398 + $0x8] sm:$0xff]
        %v401 = vld [vmem:[%s398 + $0x10] sm:$0xff]
        %v402 = vld [vmem:[%s398 + $0x18] sm:$0xff]
        %v403 = vld [vmem:[%s398 + $0x20] sm:$0xff]
        %v404 = vld [vmem:[%s398 + $0x28] sm:$0xff]
        %v405 = vld [vmem:[%s398 + $0x30] sm:$0xff]
        %v406 = vld [vmem:[%s398 + $0x38] sm:$0xff]
        %v407 = vld [vmem:[%s398 + $0x40] sm:$0xff]
        %v408 = vld [vmem:[%s398 + $0x48] sm:$0xff]
        %v409 = vld [vmem:[%s398 + $0x50] sm:$0xff]
        %v410 = vld [vmem:[%s398 + $0x58] sm:$0xff]
        %v411 = vld [vmem:[%s398 + $0x60] sm:$0xff]
        %v412 = vld [vmem:[%s398 + $0x68] sm:$0xff]
        %v413 = vld [vmem:[%s398 + $0x70] sm:$0xff]
        %v414 = vld [vmem:[%s398 + $0x78] sm:$0xff]
        %v415 = vld [vmem:[%s3] sm:$0xff]
        %v416 = vld [vmem:[%s4] sm:$0x1]
        %v418 = vlaneseq
        %v419 = vshrl.u32 %v418, 7
        %v420 = vsub.s32 0, %v419
        %v421 = vrot.slane %v416, %v420
        %vm423 = vcmask 64512
        %v425 = vsel %vm423, %v399, 0
        %v428 = vsel %vm423, %v400, 0
        %v431 = vsel %vm423, %v401, 0
        %v434 = vsel %vm423, %v402, 0
        %v437 = vsel %vm423, %v403, 0
        %v440 = vsel %vm423, %v404, 0
        %v443 = vsel %vm423, %v405, 0
        %v446 = vsel %vm423, %v406, 0
        %v449 = vsel %vm423, %v407, 0
        %v452 = vsel %vm423, %v408, 0
        %v455 = vsel %vm423, %v409, 0
        %v458 = vsel %vm423, %v410, 0
        %v461 = vsel %vm423, %v411, 0
        %v464 = vsel %vm423, %v412, 0
        %v467 = vsel %vm423, %v413, 0
        %v470 = vsel %vm423, %v414, 0
        %472 = vmatprep.subr.mxu0 0.0
        %473 = vmatpush1.msra.mxu0 0.0
        %474 = vmatprep.subr.mxu0 0.0
        %475 = vmatpush1.msra.mxu0 0.0
        %476 = vmatprep.subr.mxu0 0.0
        %477 = vmatpush1.msra.mxu0 0.0
        %478 = vmatprep.subr.mxu0 0.0
        %479 = vmatpush1.msra.mxu0 0.0
        %480 = vmatprep.subr.mxu0 0.0
        %481 = vmatpush1.msra.mxu0 0.0
        %482 = vmatprep.subr.mxu0 0.0
        %483 = vmatpush1.msra.mxu0 0.0
        %484 = vmatprep.subr.mxu0 0.0
        %485 = vmatpush1.msra.mxu0 0.0
        %486 = vmatprep.subr.mxu0 0.0
        %487 = vmatpush1.msra.mxu0 0.0
        %488 = vmatprep.subr.mxu0 0.0
        %489 = vmatpush1.msra.mxu0 0.0
        %490 = vmatprep.subr.mxu0 0.0
        %491 = vmatpush1.msra.mxu0 0.0
        %492 = vmatprep.subr.mxu0 0.0
        %493 = vmatpush1.msra.mxu0 0.0
        %494 = vmatprep.subr.mxu0 0.0
        %495 = vmatpush1.msra.mxu0 0.0
        %496 = vmatprep.subr.mxu0 0.0
        %497 = vmatpush1.msra.mxu0 0.0
        %498 = vmatprep.subr.mxu0 0.0
        %499 = vmatpush1.msra.mxu0 0.0
        %500 = vmatprep.subr.mxu0 0.0
        %501 = vmatpush1.msra.mxu0 0.0
        %502 = vmatprep.subr.mxu0 0.0
        %503 = vmatpush1.msra.mxu0 %v415
        %504 = vmatprep.subr.mxu0 0.0
        %505 = vmatpush2.msra.mxu0 0.0
        %506 = vmatprep.subr.mxu0 0.0
        %507 = vmatpush2.msra.mxu0 0.0
        %508 = vmatprep.subr.mxu0 0.0
        %509 = vmatpush2.msra.mxu0 0.0
        %510 = vmatprep.subr.mxu0 0.0
        %511 = vmatpush2.msra.mxu0 0.0
        %512 = vmatprep.subr.mxu0 0.0
        %513 = vmatpush2.msra.mxu0 0.0
        %514 = vmatprep.subr.mxu0 0.0
        %515 = vmatpush2.msra.mxu0 0.0
        %516 = vmatprep.subr.mxu0 0.0
        %517 = vmatpush2.msra.mxu0 0.0
        %518 = vmatprep.subr.mxu0 0.0
        %519 = vmatpush2.msra.mxu0 0.0
        %520 = vmatprep.subr.mxu0 0.0
        %521 = vmatpush2.msra.mxu0 0.0
        %522 = vmatprep.subr.mxu0 0.0
        %523 = vmatpush2.msra.mxu0 0.0
        %524 = vmatprep.subr.mxu0 0.0
        %525 = vmatpush2.msra.mxu0 0.0
        %526 = vmatprep.subr.mxu0 0.0
        %527 = vmatpush2.msra.mxu0 0.0
        %528 = vmatprep.subr.mxu0 0.0
        %529 = vmatpush2.msra.mxu0 0.0
        %530 = vmatprep.subr.mxu0 0.0
        %531 = vmatpush2.msra.mxu0 0.0
        %532 = vmatprep.subr.mxu0 0.0
        %533 = vmatpush2.msra.mxu0 0.0
        %534 = vmatprep.subr.mxu0 0.0
        %535 = vmatpush2.msra.mxu0 0.0
        %536 = vmatprep.mubr.f32.mxu0 0.0
        %537 = vmatmul.mubr.f32.gmra.mxu0 %v425
        %v538 = vpop.f32.mrf.mxu0
        %v539 = vadd.f32 %v421, %v538
        %v540 = vpop.f32.mrf.mxu0
        %541 = vmatprep.mubr.f32.mxu0 0.0
        %542 = vmatmul.mubr.f32.gmra.mxu0 %v428
        %v543 = vpop.f32.mrf.mxu0
        %v544 = vadd.f32 %v421, %v543
        %v545 = vpop.f32.mrf.mxu0
        %546 = vmatprep.mubr.f32.mxu0 0.0
        %547 = vmatmul.mubr.f32.gmra.mxu0 %v431
        %v548 = vpop.f32.mrf.mxu0
        %v549 = vadd.f32 %v421, %v548
        %v550 = vpop.f32.mrf.mxu0
        %551 = vmatprep.mubr.f32.mxu0 0.0
        %552 = vmatmul.mubr.f32.gmra.mxu0 %v434
        %v553 = vpop.f32.mrf.mxu0
        %v554 = vadd.f32 %v421, %v553
        %v555 = vpop.f32.mrf.mxu0
        %556 = vmatprep.mubr.f32.mxu0 0.0
        %557 = vmatmul.mubr.f32.gmra.mxu0 %v437
        %v558 = vpop.f32.mrf.mxu0
        %v559 = vadd.f32 %v421, %v558
        %v560 = vpop.f32.mrf.mxu0
        %561 = vmatprep.mubr.f32.mxu0 0.0
        %562 = vmatmul.mubr.f32.gmra.mxu0 %v440
        %v563 = vpop.f32.mrf.mxu0
        %v564 = vadd.f32 %v421, %v563
        %v565 = vpop.f32.mrf.mxu0
        %566 = vmatprep.mubr.f32.mxu0 0.0
        %567 = vmatmul.mubr.f32.gmra.mxu0 %v443
        %v568 = vpop.f32.mrf.mxu0
        %v569 = vadd.f32 %v421, %v568
        %v570 = vpop.f32.mrf.mxu0
        %571 = vmatprep.mubr.f32.mxu0 0.0
        %572 = vmatmul.mubr.f32.gmra.mxu0 %v446
        %v573 = vpop.f32.mrf.mxu0
        %v574 = vadd.f32 %v421, %v573
        %v575 = vpop.f32.mrf.mxu0
        %576 = vmatprep.mubr.f32.mxu0 0.0
        %577 = vmatmul.mubr.f32.gmra.mxu0 %v449
        %v578 = vpop.f32.mrf.mxu0
        %v579 = vadd.f32 %v421, %v578
        %v580 = vpop.f32.mrf.mxu0
        %581 = vmatprep.mubr.f32.mxu0 0.0
        %582 = vmatmul.mubr.f32.gmra.mxu0 %v452
        %v583 = vpop.f32.mrf.mxu0
        %v584 = vadd.f32 %v421, %v583
        %v585 = vpop.f32.mrf.mxu0
        %586 = vmatprep.mubr.f32.mxu0 0.0
        %587 = vmatmul.mubr.f32.gmra.mxu0 %v455
        %v588 = vpop.f32.mrf.mxu0
        %v589 = vadd.f32 %v421, %v588
        %v590 = vpop.f32.mrf.mxu0
        %591 = vmatprep.mubr.f32.mxu0 0.0
        %592 = vmatmul.mubr.f32.gmra.mxu0 %v458
        %v593 = vpop.f32.mrf.mxu0
        %v594 = vadd.f32 %v421, %v593
        %v595 = vpop.f32.mrf.mxu0
        %596 = vmatprep.mubr.f32.mxu0 0.0
        %597 = vmatmul.mubr.f32.gmra.mxu0 %v461
        %v598 = vpop.f32.mrf.mxu0
        %v599 = vadd.f32 %v421, %v598
        %v600 = vpop.f32.mrf.mxu0
        %601 = vmatprep.mubr.f32.mxu0 0.0
        %602 = vmatmul.mubr.f32.gmra.mxu0 %v464
        %v603 = vpop.f32.mrf.mxu0
        %v604 = vadd.f32 %v421, %v603
        %v605 = vpop.f32.mrf.mxu0
        %606 = vmatprep.mubr.f32.mxu0 0.0
        %607 = vmatmul.mubr.f32.gmra.mxu0 %v467
        %v608 = vpop.f32.mrf.mxu0
        %v609 = vadd.f32 %v421, %v608
        %v610 = vpop.f32.mrf.mxu0
        %611 = vmatprep.mubr.f32.mxu0 0.0
        %612 = vmatmul.mubr.f32.gmra.mxu0 %v470
        %v613 = vpop.f32.mrf.mxu0
        %v614 = vadd.f32 %v421, %v613
        %v615 = vpop.f32.mrf.mxu0
        %616 = vdwg.mxu0
        %v617 = vld [vmem:[%s385] sm:$0xff]
        %v618 = vld [vmem:[%s5] sm:$0x1]
        %v620 = vlaneseq
        %v621 = vshrl.u32 %v620, 7
        %v622 = vsub.s32 0, %v621
        %v623 = vrot.slane %v618, %v622
        %v626 = vsel %vm423, %v539, 0
        %v629 = vsel %vm423, %v544, 0
        %v632 = vsel %vm423, %v549, 0
        %v635 = vsel %vm423, %v554, 0
        %v638 = vsel %vm423, %v559, 0
        %v641 = vsel %vm423, %v564, 0
        %v644 = vsel %vm423, %v569, 0
        %v647 = vsel %vm423, %v574, 0
        %v650 = vsel %vm423, %v579, 0
        %v653 = vsel %vm423, %v584, 0
        %v656 = vsel %vm423, %v589, 0
        %v659 = vsel %vm423, %v594, 0
        %v662 = vsel %vm423, %v599, 0
        %v665 = vsel %vm423, %v604, 0
        %v668 = vsel %vm423, %v609, 0
        %v671 = vsel %vm423, %v614, 0
        %673 = vmatprep.subr.mxu0 0.0
        %674 = vmatpush1.msra.mxu0 0.0
        %675 = vmatprep.subr.mxu0 0.0
        %676 = vmatpush1.msra.mxu0 0.0
        %677 = vmatprep.subr.mxu0 0.0
        %678 = vmatpush1.msra.mxu0 0.0
        %679 = vmatprep.subr.mxu0 0.0
        %680 = vmatpush1.msra.mxu0 0.0
        %681 = vmatprep.subr.mxu0 0.0
        %682 = vmatpush1.msra.mxu0 0.0
        %683 = vmatprep.subr.mxu0 0.0
        %684 = vmatpush1.msra.mxu0 0.0
        %685 = vmatprep.subr.mxu0 0.0
        %686 = vmatpush1.msra.mxu0 0.0
        %687 = vmatprep.subr.mxu0 0.0
        %688 = vmatpush1.msra.mxu0 0.0
        %689 = vmatprep.subr.mxu0 0.0
        %690 = vmatpush1.msra.mxu0 0.0
        %691 = vmatprep.subr.mxu0 0.0
        %692 = vmatpush1.msra.mxu0 0.0
        %693 = vmatprep.subr.mxu0 0.0
        %694 = vmatpush1.msra.mxu0 0.0
        %695 = vmatprep.subr.mxu0 0.0
        %696 = vmatpush1.msra.mxu0 0.0
        %697 = vmatprep.subr.mxu0 0.0
        %698 = vmatpush1.msra.mxu0 0.0
        %699 = vmatprep.subr.mxu0 0.0
        %700 = vmatpush1.msra.mxu0 0.0
        %701 = vmatprep.subr.mxu0 0.0
        %702 = vmatpush1.msra.mxu0 0.0
        %703 = vmatprep.subr.mxu0 0.0
        %704 = vmatpush1.msra.mxu0 %v617
        %705 = vmatprep.subr.mxu0 0.0
        %706 = vmatpush2.msra.mxu0 0.0
        %707 = vmatprep.subr.mxu0 0.0
        %708 = vmatpush2.msra.mxu0 0.0
        %709 = vmatprep.subr.mxu0 0.0
        %710 = vmatpush2.msra.mxu0 0.0
        %711 = vmatprep.subr.mxu0 0.0
        %712 = vmatpush2.msra.mxu0 0.0
        %713 = vmatprep.subr.mxu0 0.0
        %714 = vmatpush2.msra.mxu0 0.0
        %715 = vmatprep.subr.mxu0 0.0
        %716 = vmatpush2.msra.mxu0 0.0
        %717 = vmatprep.subr.mxu0 0.0
        %718 = vmatpush2.msra.mxu0 0.0
        %719 = vmatprep.subr.mxu0 0.0
        %720 = vmatpush2.msra.mxu0 0.0
        %721 = vmatprep.subr.mxu0 0.0
        %722 = vmatpush2.msra.mxu0 0.0
        %723 = vmatprep.subr.mxu0 0.0
        %724 = vmatpush2.msra.mxu0 0.0
        %725 = vmatprep.subr.mxu0 0.0
        %726 = vmatpush2.msra.mxu0 0.0
        %727 = vmatprep.subr.mxu0 0.0
        %728 = vmatpush2.msra.mxu0 0.0
        %729 = vmatprep.subr.mxu0 0.0
        %730 = vmatpush2.msra.mxu0 0.0
        %731 = vmatprep.subr.mxu0 0.0
        %732 = vmatpush2.msra.mxu0 0.0
        %733 = vmatprep.subr.mxu0 0.0
        %734 = vmatpush2.msra.mxu0 0.0
        %735 = vmatprep.subr.mxu0 0.0
        %736 = vmatpush2.msra.mxu0 0.0
        %737 = vmatprep.mubr.f32.mxu0 0.0
        %738 = vmatmul.mubr.f32.gmra.mxu0 %v626
        %v739 = vpop.f32.mrf.mxu0
        %v740 = vadd.f32 %v623, %v739
        %v741 = vpop.f32.mrf.mxu0
        %742 = vmatprep.mubr.f32.mxu0 0.0
        %743 = vmatmul.mubr.f32.gmra.mxu0 %v629
        %v744 = vpop.f32.mrf.mxu0
        %v745 = vadd.f32 %v623, %v744
        %v746 = vpop.f32.mrf.mxu0
        %747 = vmatprep.mubr.f32.mxu0 0.0
        %748 = vmatmul.mubr.f32.gmra.mxu0 %v632
        %v749 = vpop.f32.mrf.mxu0
        %v750 = vadd.f32 %v623, %v749
        %v751 = vpop.f32.mrf.mxu0
        %752 = vmatprep.mubr.f32.mxu0 0.0
        %753 = vmatmul.mubr.f32.gmra.mxu0 %v635
        %v754 = vpop.f32.mrf.mxu0
        %v755 = vadd.f32 %v623, %v754
        %v756 = vpop.f32.mrf.mxu0
        %757 = vmatprep.mubr.f32.mxu0 0.0
        %758 = vmatmul.mubr.f32.gmra.mxu0 %v638
        %v759 = vpop.f32.mrf.mxu0
        %v760 = vadd.f32 %v623, %v759
        %v761 = vpop.f32.mrf.mxu0
        %762 = vmatprep.mubr.f32.mxu0 0.0
        %763 = vmatmul.mubr.f32.gmra.mxu0 %v641
        %v764 = vpop.f32.mrf.mxu0
        %v765 = vadd.f32 %v623, %v764
        %v766 = vpop.f32.mrf.mxu0
        %767 = vmatprep.mubr.f32.mxu0 0.0
        %768 = vmatmul.mubr.f32.gmra.mxu0 %v644
        %v769 = vpop.f32.mrf.mxu0
        %v770 = vadd.f32 %v623, %v769
        %v771 = vpop.f32.mrf.mxu0
        %772 = vmatprep.mubr.f32.mxu0 0.0
        %773 = vmatmul.mubr.f32.gmra.mxu0 %v647
        %v774 = vpop.f32.mrf.mxu0
        %v775 = vadd.f32 %v623, %v774
        %v776 = vpop.f32.mrf.mxu0
        %777 = vmatprep.mubr.f32.mxu0 0.0
        %778 = vmatmul.mubr.f32.gmra.mxu0 %v650
        %v779 = vpop.f32.mrf.mxu0
        %v780 = vadd.f32 %v623, %v779
        %v781 = vpop.f32.mrf.mxu0
        %782 = vmatprep.mubr.f32.mxu0 0.0
        %783 = vmatmul.mubr.f32.gmra.mxu0 %v653
        %v784 = vpop.f32.mrf.mxu0
        %v785 = vadd.f32 %v623, %v784
        %v786 = vpop.f32.mrf.mxu0
        %787 = vmatprep.mubr.f32.mxu0 0.0
        %788 = vmatmul.mubr.f32.gmra.mxu0 %v656
        %v789 = vpop.f32.mrf.mxu0
        %v790 = vadd.f32 %v623, %v789
        %v791 = vpop.f32.mrf.mxu0
        %792 = vmatprep.mubr.f32.mxu0 0.0
        %793 = vmatmul.mubr.f32.gmra.mxu0 %v659
        %v794 = vpop.f32.mrf.mxu0
        %v795 = vadd.f32 %v623, %v794
        %v796 = vpop.f32.mrf.mxu0
        %797 = vmatprep.mubr.f32.mxu0 0.0
        %798 = vmatmul.mubr.f32.gmra.mxu0 %v662
        %v799 = vpop.f32.mrf.mxu0
        %v800 = vadd.f32 %v623, %v799
        %v801 = vpop.f32.mrf.mxu0
        %802 = vmatprep.mubr.f32.mxu0 0.0
        %803 = vmatmul.mubr.f32.gmra.mxu0 %v665
        %v804 = vpop.f32.mrf.mxu0
        %v805 = vadd.f32 %v623, %v804
        %v806 = vpop.f32.mrf.mxu0
        %807 = vmatprep.mubr.f32.mxu0 0.0
        %808 = vmatmul.mubr.f32.gmra.mxu0 %v668
        %v809 = vpop.f32.mrf.mxu0
        %v810 = vadd.f32 %v623, %v809
        %v811 = vpop.f32.mrf.mxu0
        %812 = vmatprep.mubr.f32.mxu0 0.0
        %813 = vmatmul.mubr.f32.gmra.mxu0 %v671
        %v814 = vpop.f32.mrf.mxu0
        %v815 = vadd.f32 %v623, %v814
        %v816 = vpop.f32.mrf.mxu0
        %817 = vdwg.mxu0
        %818 = vmax.xlane.f32.xlu0 %v740
        %v819 = vpop.xlane.xlu0 %818
        %820 = vmax.xlane.f32.xlu0 %v745
        %v821 = vpop.xlane.xlu0 %820
        %822 = vmax.xlane.f32.xlu0 %v750
        %v823 = vpop.xlane.xlu0 %822
        %824 = vmax.xlane.f32.xlu0 %v755
        %v825 = vpop.xlane.xlu0 %824
        %826 = vmax.xlane.f32.xlu0 %v760
        %v827 = vpop.xlane.xlu0 %826
        %828 = vmax.xlane.f32.xlu0 %v765
        %v829 = vpop.xlane.xlu0 %828
        %830 = vmax.xlane.f32.xlu0 %v770
        %v831 = vpop.xlane.xlu0 %830
        %832 = vmax.xlane.f32.xlu0 %v775
        %v833 = vpop.xlane.xlu0 %832
        %834 = vmax.xlane.f32.xlu0 %v780
        %v835 = vpop.xlane.xlu0 %834
        %836 = vmax.xlane.f32.xlu0 %v785
        %v837 = vpop.xlane.xlu0 %836
        %838 = vmax.xlane.f32.xlu0 %v790
        %v839 = vpop.xlane.xlu0 %838
        %840 = vmax.xlane.f32.xlu0 %v795
        %v841 = vpop.xlane.xlu0 %840
        %842 = vmax.xlane.f32.xlu0 %v800
        %v843 = vpop.xlane.xlu0 %842
        %844 = vmax.xlane.f32.xlu0 %v805
        %v845 = vpop.xlane.xlu0 %844
        %846 = vmax.xlane.f32.xlu0 %v810
        %v847 = vpop.xlane.xlu0 %846
        %848 = vmax.xlane.f32.xlu0 %v815
        %v849 = vpop.xlane.xlu0 %848
        %v850 = vsub.f32 %v740, %v819
        %v851 = vsub.f32 %v745, %v821
        %v852 = vsub.f32 %v750, %v823
        %v853 = vsub.f32 %v755, %v825
        %v854 = vsub.f32 %v760, %v827
        %v855 = vsub.f32 %v765, %v829
        %v856 = vsub.f32 %v770, %v831
        %v857 = vsub.f32 %v775, %v833
        %v858 = vsub.f32 %v780, %v835
        %v859 = vsub.f32 %v785, %v837
        %v860 = vsub.f32 %v790, %v839
        %v861 = vsub.f32 %v795, %v841
        %v862 = vsub.f32 %v800, %v843
        %v863 = vsub.f32 %v805, %v845
        %v864 = vsub.f32 %v810, %v847
        %v865 = vsub.f32 %v815, %v849
        %v866 = vmul.f32 %v850, 1.442695
        %v867 = vpow.pop %v866
        %v868 = vmul.f32 %v851, 1.442695
        %v869 = vpow.pop %v868
        %v870 = vmul.f32 %v852, 1.442695
        %v871 = vpow.pop %v870
        %v872 = vmul.f32 %v853, 1.442695
        %v873 = vpow.pop %v872
        %v874 = vmul.f32 %v854, 1.442695
        %v875 = vpow.pop %v874
        %v876 = vmul.f32 %v855, 1.442695
        %v877 = vpow.pop %v876
        %v878 = vmul.f32 %v856, 1.442695
        %v879 = vpow.pop %v878
        %v880 = vmul.f32 %v857, 1.442695
        %v881 = vpow.pop %v880
        %v882 = vmul.f32 %v858, 1.442695
        %v883 = vpow.pop %v882
        %v884 = vmul.f32 %v859, 1.442695
        %v885 = vpow.pop %v884
        %v886 = vmul.f32 %v860, 1.442695
        %v887 = vpow.pop %v886
        %v888 = vmul.f32 %v861, 1.442695
        %v889 = vpow.pop %v888
        %v890 = vmul.f32 %v862, 1.442695
        %v891 = vpow.pop %v890
        %v892 = vmul.f32 %v863, 1.442695
        %v893 = vpow.pop %v892
        %v894 = vmul.f32 %v864, 1.442695
        %v895 = vpow.pop %v894
        %v896 = vmul.f32 %v865, 1.442695
        %v897 = vpow.pop %v896
        %898 = vadd.xlane.f32.xlu0 %v867
        %v899 = vpop.xlane.xlu0 %898
        %900 = vadd.xlane.f32.xlu0 %v869
        %v901 = vpop.xlane.xlu0 %900
        %902 = vadd.xlane.f32.xlu0 %v871
        %v903 = vpop.xlane.xlu0 %902
        %904 = vadd.xlane.f32.xlu0 %v873
        %v905 = vpop.xlane.xlu0 %904
        %906 = vadd.xlane.f32.xlu0 %v875
        %v907 = vpop.xlane.xlu0 %906
        %908 = vadd.xlane.f32.xlu0 %v877
        %v909 = vpop.xlane.xlu0 %908
        %910 = vadd.xlane.f32.xlu0 %v879
        %v911 = vpop.xlane.xlu0 %910
        %912 = vadd.xlane.f32.xlu0 %v881
        %v913 = vpop.xlane.xlu0 %912
        %914 = vadd.xlane.f32.xlu0 %v883
        %v915 = vpop.xlane.xlu0 %914
        %916 = vadd.xlane.f32.xlu0 %v885
        %v917 = vpop.xlane.xlu0 %916
        %918 = vadd.xlane.f32.xlu0 %v887
        %v919 = vpop.xlane.xlu0 %918
        %920 = vadd.xlane.f32.xlu0 %v889
        %v921 = vpop.xlane.xlu0 %920
        %922 = vadd.xlane.f32.xlu0 %v891
        %v923 = vpop.xlane.xlu0 %922
        %924 = vadd.xlane.f32.xlu0 %v893
        %v925 = vpop.xlane.xlu0 %924
        %926 = vadd.xlane.f32.xlu0 %v895
        %v927 = vpop.xlane.xlu0 %926
        %928 = vadd.xlane.f32.xlu0 %v897
        %v929 = vpop.xlane.xlu0 %928
        %v930 = vrcp.pop %v899
        %v931 = vrcp.pop %v901
        %v932 = vrcp.pop %v903
        %v933 = vrcp.pop %v905
        %v934 = vrcp.pop %v907
        %v935 = vrcp.pop %v909
        %v936 = vrcp.pop %v911
        %v937 = vrcp.pop %v913
        %v938 = vrcp.pop %v915
        %v939 = vrcp.pop %v917
        %v940 = vrcp.pop %v919
        %v941 = vrcp.pop %v921
        %v942 = vrcp.pop %v923
        %v943 = vrcp.pop %v925
        %v944 = vrcp.pop %v927
        %v945 = vrcp.pop %v929
        %v946 = vmul.f32 %v867, %v930
        %v947 = vmul.f32 %v869, %v931
        %v948 = vmul.f32 %v871, %v932
        %v949 = vmul.f32 %v873, %v933
        %v950 = vmul.f32 %v875, %v934
        %v951 = vmul.f32 %v877, %v935
        %v952 = vmul.f32 %v879, %v936
        %v953 = vmul.f32 %v881, %v937
        %v954 = vmul.f32 %v883, %v938
        %v955 = vmul.f32 %v885, %v939
        %v956 = vmul.f32 %v887, %v940
        %v957 = vmul.f32 %v889, %v941
        %v958 = vmul.f32 %v891, %v942
        %v959 = vmul.f32 %v893, %v943
        %v960 = vmul.f32 %v895, %v944
        %v961 = vmul.f32 %v897, %v945
        %962 = vst [vmem:[%s366] sm:$0xff] %v946
        %963 = vst [vmem:[%s366 + $0x8] sm:$0xff] %v947
        %964 = vst [vmem:[%s366 + $0x10] sm:$0xff] %v948
        %965 = vst [vmem:[%s366 + $0x18] sm:$0xff] %v949
        %966 = vst [vmem:[%s366 + $0x20] sm:$0xff] %v950
        %967 = vst [vmem:[%s366 + $0x28] sm:$0xff] %v951
        %968 = vst [vmem:[%s366 + $0x30] sm:$0xff] %v952
        %969 = vst [vmem:[%s366 + $0x38] sm:$0xff] %v953
        %970 = vst [vmem:[%s366 + $0x40] sm:$0xff] %v954
        %971 = vst [vmem:[%s366 + $0x48] sm:$0xff] %v955
        %972 = vst [vmem:[%s366 + $0x50] sm:$0xff] %v956
        %973 = vst [vmem:[%s366 + $0x58] sm:$0xff] %v957
        %974 = vst [vmem:[%s366 + $0x60] sm:$0xff] %v958
        %975 = vst [vmem:[%s366 + $0x68] sm:$0xff] %v959
        %976 = vst [vmem:[%s366 + $0x70] sm:$0xff] %v960
        %977 = vst [vmem:[%s366 + $0x78] sm:$0xff] %v961
        %v978 = vld [vmem:[%s371] sm:$0xff]
        %v979 = vld [vmem:[%s371 + $0x8] sm:$0xff]
        %v980 = vld [vmem:[%s371 + $0x10] sm:$0xff]
        %v981 = vld [vmem:[%s371 + $0x18] sm:$0xff]
        %v982 = vld [vmem:[%s371 + $0x20] sm:$0xff]
        %v983 = vld [vmem:[%s371 + $0x28] sm:$0xff]
        %v984 = vld [vmem:[%s371 + $0x30] sm:$0xff]
        %v985 = vld [vmem:[%s371 + $0x38] sm:$0xff]
        %v986 = vld [vmem:[%s371 + $0x40] sm:$0xff]
        %v987 = vld [vmem:[%s371 + $0x48] sm:$0xff]
        %v988 = vld [vmem:[%s371 + $0x50] sm:$0xff]
        %v989 = vld [vmem:[%s371 + $0x58] sm:$0xff]
        %v990 = vld [vmem:[%s371 + $0x60] sm:$0xff]
        %v991 = vld [vmem:[%s371 + $0x68] sm:$0xff]
        %v992 = vld [vmem:[%s371 + $0x70] sm:$0xff]
        %v993 = vld [vmem:[%s371 + $0x78] sm:$0xff]
        %994 = vmatprep.subr.mxu0 0.0
        %995 = vmatpush1.msra.mxu0 %v993
        %996 = vmatprep.subr.mxu0 0.0
        %997 = vmatpush1.msra.mxu0 %v992
        %998 = vmatprep.subr.mxu0 0.0
        %999 = vmatpush1.msra.mxu0 %v991
        %1000 = vmatprep.subr.mxu0 0.0
        %1001 = vmatpush1.msra.mxu0 %v990
        %1002 = vmatprep.subr.mxu0 0.0
        %1003 = vmatpush1.msra.mxu0 %v989
        %1004 = vmatprep.subr.mxu0 0.0
        %1005 = vmatpush1.msra.mxu0 %v988
        %1006 = vmatprep.subr.mxu0 0.0
        %1007 = vmatpush1.msra.mxu0 %v987
        %1008 = vmatprep.subr.mxu0 0.0
        %1009 = vmatpush1.msra.mxu0 %v986
        %1010 = vmatprep.subr.mxu0 0.0
        %1011 = vmatpush1.msra.mxu0 %v985
        %1012 = vmatprep.subr.mxu0 0.0
        %1013 = vmatpush1.msra.mxu0 %v984
        %1014 = vmatprep.subr.mxu0 0.0
        %1015 = vmatpush1.msra.mxu0 %v983
        %1016 = vmatprep.subr.mxu0 0.0
        %1017 = vmatpush1.msra.mxu0 %v982
        %1018 = vmatprep.subr.mxu0 0.0
        %1019 = vmatpush1.msra.mxu0 %v981
        %1020 = vmatprep.subr.mxu0 0.0
        %1021 = vmatpush1.msra.mxu0 %v980
        %1022 = vmatprep.subr.mxu0 0.0
        %1023 = vmatpush1.msra.mxu0 %v979
        %1024 = vmatprep.subr.mxu0 0.0
        %1025 = vmatpush1.msra.mxu0 %v978
        %1026 = vmatprep.subr.mxu0 0.0
        %1027 = vmatpush2.msra.mxu0 0.0
        %1028 = vmatprep.subr.mxu0 0.0
        %1029 = vmatpush2.msra.mxu0 0.0
        %1030 = vmatprep.subr.mxu0 0.0
        %1031 = vmatpush2.msra.mxu0 0.0
        %1032 = vmatprep.subr.mxu0 0.0
        %1033 = vmatpush2.msra.mxu0 0.0
        %1034 = vmatprep.subr.mxu0 0.0
        %1035 = vmatpush2.msra.mxu0 0.0
        %1036 = vmatprep.subr.mxu0 0.0
        %1037 = vmatpush2.msra.mxu0 0.0
        %1038 = vmatprep.subr.mxu0 0.0
        %1039 = vmatpush2.msra.mxu0 0.0
        %1040 = vmatprep.subr.mxu0 0.0
        %1041 = vmatpush2.msra.mxu0 0.0
        %1042 = vmatprep.subr.mxu0 0.0
        %1043 = vmatpush2.msra.mxu0 0.0
        %1044 = vmatprep.subr.mxu0 0.0
        %1045 = vmatpush2.msra.mxu0 0.0
        %1046 = vmatprep.subr.mxu0 0.0
        %1047 = vmatpush2.msra.mxu0 0.0
        %1048 = vmatprep.subr.mxu0 0.0
        %1049 = vmatpush2.msra.mxu0 0.0
        %1050 = vmatprep.subr.mxu0 0.0
        %1051 = vmatpush2.msra.mxu0 0.0
        %1052 = vmatprep.subr.mxu0 0.0
        %1053 = vmatpush2.msra.mxu0 0.0
        %1054 = vmatprep.subr.mxu0 0.0
        %1055 = vmatpush2.msra.mxu0 0.0
        %1056 = vmatprep.subr.mxu0 0.0
        %1057 = vmatpush2.msra.mxu0 0.0
        %1058 = vmatprep.mubr.f32.mxu0 0.0
        %1059 = vmatmul.mubr.f32.gmra.mxu0 %v867
        %v1060 = vpop.f32.mrf.mxu0
        %v1061 = vadd.f32 0.0, %v1060
        %v1062 = vpop.f32.mrf.mxu0
        %1063 = vmatprep.mubr.f32.mxu0 0.0
        %1064 = vmatmul.mubr.f32.gmra.mxu0 %v869
        %v1065 = vpop.f32.mrf.mxu0
        %v1066 = vadd.f32 0.0, %v1065
        %v1067 = vpop.f32.mrf.mxu0
        %1068 = vmatprep.mubr.f32.mxu0 0.0
        %1069 = vmatmul.mubr.f32.gmra.mxu0 %v871
        %v1070 = vpop.f32.mrf.mxu0
        %v1071 = vadd.f32 0.0, %v1070
        %v1072 = vpop.f32.mrf.mxu0
        %1073 = vmatprep.mubr.f32.mxu0 0.0
        %1074 = vmatmul.mubr.f32.gmra.mxu0 %v873
        %v1075 = vpop.f32.mrf.mxu0
        %v1076 = vadd.f32 0.0, %v1075
        %v1077 = vpop.f32.mrf.mxu0
        %1078 = vmatprep.mubr.f32.mxu0 0.0
        %1079 = vmatmul.mubr.f32.gmra.mxu0 %v875
        %v1080 = vpop.f32.mrf.mxu0
        %v1081 = vadd.f32 0.0, %v1080
        %v1082 = vpop.f32.mrf.mxu0
        %1083 = vmatprep.mubr.f32.mxu0 0.0
        %1084 = vmatmul.mubr.f32.gmra.mxu0 %v877
        %v1085 = vpop.f32.mrf.mxu0
        %v1086 = vadd.f32 0.0, %v1085
        %v1087 = vpop.f32.mrf.mxu0
        %1088 = vmatprep.mubr.f32.mxu0 0.0
        %1089 = vmatmul.mubr.f32.gmra.mxu0 %v879
        %v1090 = vpop.f32.mrf.mxu0
        %v1091 = vadd.f32 0.0, %v1090
        %v1092 = vpop.f32.mrf.mxu0
        %1093 = vmatprep.mubr.f32.mxu0 0.0
        %1094 = vmatmul.mubr.f32.gmra.mxu0 %v881
        %v1095 = vpop.f32.mrf.mxu0
        %v1096 = vadd.f32 0.0, %v1095
        %v1097 = vpop.f32.mrf.mxu0
        %1098 = vmatprep.mubr.f32.mxu0 0.0
        %1099 = vmatmul.mubr.f32.gmra.mxu0 %v883
        %v1100 = vpop.f32.mrf.mxu0
        %v1101 = vadd.f32 0.0, %v1100
        %v1102 = vpop.f32.mrf.mxu0
        %1103 = vmatprep.mubr.f32.mxu0 0.0
        %1104 = vmatmul.mubr.f32.gmra.mxu0 %v885
        %v1105 = vpop.f32.mrf.mxu0
        %v1106 = vadd.f32 0.0, %v1105
        %v1107 = vpop.f32.mrf.mxu0
        %1108 = vmatprep.mubr.f32.mxu0 0.0
        %1109 = vmatmul.mubr.f32.gmra.mxu0 %v887
        %v1110 = vpop.f32.mrf.mxu0
        %v1111 = vadd.f32 0.0, %v1110
        %v1112 = vpop.f32.mrf.mxu0
        %1113 = vmatprep.mubr.f32.mxu0 0.0
        %1114 = vmatmul.mubr.f32.gmra.mxu0 %v889
        %v1115 = vpop.f32.mrf.mxu0
        %v1116 = vadd.f32 0.0, %v1115
        %v1117 = vpop.f32.mrf.mxu0
        %1118 = vmatprep.mubr.f32.mxu0 0.0
        %1119 = vmatmul.mubr.f32.gmra.mxu0 %v891
        %v1120 = vpop.f32.mrf.mxu0
        %v1121 = vadd.f32 0.0, %v1120
        %v1122 = vpop.f32.mrf.mxu0
        %1123 = vmatprep.mubr.f32.mxu0 0.0
        %1124 = vmatmul.mubr.f32.gmra.mxu0 %v893
        %v1125 = vpop.f32.mrf.mxu0
        %v1126 = vadd.f32 0.0, %v1125
        %v1127 = vpop.f32.mrf.mxu0
        %1128 = vmatprep.mubr.f32.mxu0 0.0
        %1129 = vmatmul.mubr.f32.gmra.mxu0 %v895
        %v1130 = vpop.f32.mrf.mxu0
        %v1131 = vadd.f32 0.0, %v1130
        %v1132 = vpop.f32.mrf.mxu0
        %1133 = vmatprep.mubr.f32.mxu0 0.0
        %1134 = vmatmul.mubr.f32.gmra.mxu0 %v897
        %v1135 = vpop.f32.mrf.mxu0
        %v1136 = vadd.f32 0.0, %v1135
        %v1137 = vpop.f32.mrf.mxu0
        %1138 = vdwg.mxu0
        %s1139 = sld [smem:[#allocation2]]
        %v1140 = vmul.f32 %v1061, %v930
        %v1141 = vmul.f32 %v1066, %v931
        %v1142 = vmul.f32 %v1071, %v932
        %v1143 = vmul.f32 %v1076, %v933
        %v1144 = vmul.f32 %v1081, %v934
        %v1145 = vmul.f32 %v1086, %v935
        %v1146 = vmul.f32 %v1091, %v936
        %v1147 = vmul.f32 %v1096, %v937
        %v1148 = vmul.f32 %v1101, %v938
        %v1149 = vmul.f32 %v1106, %v939
        %v1150 = vmul.f32 %v1111, %v940
        %v1151 = vmul.f32 %v1116, %v941
        %v1152 = vmul.f32 %v1121, %v942
        %v1153 = vmul.f32 %v1126, %v943
        %v1154 = vmul.f32 %v1131, %v944
        %v1155 = vmul.f32 %v1136, %v945
        %v1156 = vstv %s1139
        %v1157 = vmul.f32 %v1156, %v1140
        %v1158 = vmul.f32 %v1156, %v1141
        %v1159 = vmul.f32 %v1156, %v1142
        %v1160 = vmul.f32 %v1156, %v1143
        %v1161 = vmul.f32 %v1156, %v1144
        %v1162 = vmul.f32 %v1156, %v1145
        %v1163 = vmul.f32 %v1156, %v1146
        %v1164 = vmul.f32 %v1156, %v1147
        %v1165 = vmul.f32 %v1156, %v1148
        %v1166 = vmul.f32 %v1156, %v1149
        %v1167 = vmul.f32 %v1156, %v1150
        %v1168 = vmul.f32 %v1156, %v1151
        %v1169 = vmul.f32 %v1156, %v1152
        %v1170 = vmul.f32 %v1156, %v1153
        %v1171 = vmul.f32 %v1156, %v1154
        %v1172 = vmul.f32 %v1156, %v1155
        %v1173 = vld [vmem:[%s380] sm:$0xff]
        %v1174 = vld [vmem:[%s380 + $0x8] sm:$0xff]
        %v1175 = vld [vmem:[%s380 + $0x10] sm:$0xff]
        %v1176 = vld [vmem:[%s380 + $0x18] sm:$0xff]
        %v1177 = vld [vmem:[%s380 + $0x20] sm:$0xff]
        %v1178 = vld [vmem:[%s380 + $0x28] sm:$0xff]
        %v1179 = vld [vmem:[%s380 + $0x30] sm:$0xff]
        %v1180 = vld [vmem:[%s380 + $0x38] sm:$0xff]
        %v1181 = vld [vmem:[%s380 + $0x40] sm:$0xff]
        %v1182 = vld [vmem:[%s380 + $0x48] sm:$0xff]
        %v1183 = vld [vmem:[%s380 + $0x50] sm:$0xff]
        %v1184 = vld [vmem:[%s380 + $0x58] sm:$0xff]
        %v1185 = vld [vmem:[%s380 + $0x60] sm:$0xff]
        %v1186 = vld [vmem:[%s380 + $0x68] sm:$0xff]
        %v1187 = vld [vmem:[%s380 + $0x70] sm:$0xff]
        %v1188 = vld [vmem:[%s380 + $0x78] sm:$0xff]
        %v1189 = vadd.f32 %v1157, %v1173
        %v1190 = vadd.f32 %v1158, %v1174
        %v1191 = vadd.f32 %v1159, %v1175
        %v1192 = vadd.f32 %v1160, %v1176
        %v1193 = vadd.f32 %v1161, %v1177
        %v1194 = vadd.f32 %v1162, %v1178
        %v1195 = vadd.f32 %v1163, %v1179
        %v1196 = vadd.f32 %v1164, %v1180
        %v1197 = vadd.f32 %v1165, %v1181
        %v1198 = vadd.f32 %v1166, %v1182
        %v1199 = vadd.f32 %v1167, %v1183
        %v1200 = vadd.f32 %v1168, %v1184
        %v1201 = vadd.f32 %v1169, %v1185
        %v1202 = vadd.f32 %v1170, %v1186
        %v1203 = vadd.f32 %v1171, %v1187
        %v1204 = vadd.f32 %v1172, %v1188
        %1205 = vst.msk [vmem:[%s394] sm:$0xff] %vm423, %v1189
        %1206 = vst.msk [vmem:[%s394 + $0x8] sm:$0xff] %vm423, %v1190
        %1207 = vst.msk [vmem:[%s394 + $0x10] sm:$0xff] %vm423, %v1191
        %1208 = vst.msk [vmem:[%s394 + $0x18] sm:$0xff] %vm423, %v1192
        %1209 = vst.msk [vmem:[%s394 + $0x20] sm:$0xff] %vm423, %v1193
        %1210 = vst.msk [vmem:[%s394 + $0x28] sm:$0xff] %vm423, %v1194
        %1211 = vst.msk [vmem:[%s394 + $0x30] sm:$0xff] %vm423, %v1195
        %1212 = vst.msk [vmem:[%s394 + $0x38] sm:$0xff] %vm423, %v1196
        %1213 = vst.msk [vmem:[%s394 + $0x40] sm:$0xff] %vm423, %v1197
        %1214 = vst.msk [vmem:[%s394 + $0x48] sm:$0xff] %vm423, %v1198
        %1215 = vst.msk [vmem:[%s394 + $0x50] sm:$0xff] %vm423, %v1199
        %1216 = vst.msk [vmem:[%s394 + $0x58] sm:$0xff] %vm423, %v1200
        %1217 = vst.msk [vmem:[%s394 + $0x60] sm:$0xff] %vm423, %v1201
        %1218 = vst.msk [vmem:[%s394 + $0x68] sm:$0xff] %vm423, %v1202
        %1219 = vst.msk [vmem:[%s394 + $0x70] sm:$0xff] %vm423, %v1203
        %1220 = vst.msk [vmem:[%s394 + $0x78] sm:$0xff] %vm423, %v1204
        %s1221 = smul.u32 16, %s29
        %p1222 = scmp.lt.s32.totalorder %s28, 1
        %s1223 = scalar_select %p1222, %s28, 1
        %p1224 = scmp.lt.s32.totalorder %s1221, 15
        %s1225 = scalar_select %p1224, %s1221, 15
        %s1226 = smul.addr %s1223, 16
        %s1227 = sadd.s32 %s1225, %s1226
        %s1228 = smul.addr %s1227, 8
        %s1229 = scalar_lea.vmem %s7, %s1228
        %s1230 = sand.u32 %s238, 1
        %s1231 = scalar_lea.sflag [#allocation4], %s1230
        %s1232 = sand.u32 %s238, 1
        %s1233 = smul.addr %s1232, 128
        %s1234 = scalar_lea.vmem [#allocation3], %s1233
        // Predicated region
        $region49: #{tpu_custom_call.1} parent=47 // pred_check
          %p1235 = pneg %p220
        $region50: #{tpu_custom_call.1} parent=47 // pred_check_branch
          %1237 = sbr.rel (%p1235) target = $region52
        $region51: #{tpu_custom_call.1} parent=47 // pred_region
          %s1238 = smul.u32 16, %s29
        $region52: #{tpu_custom_call.1} parent=47 // pred_fallthru
          _
        // Predicated region
        $region53: #{tpu_custom_call.1} parent=47 // pred_check
          %p1239 = pneg %p248
        $region54: #{tpu_custom_call.1} parent=47 // pred_check_branch
          %1241 = sbr.rel (%p1239) target = $region56
        $region55: #{tpu_custom_call.1} parent=47 // pred_region
          %s1242 = smul.u32 16, %s29
          %s1244 = ssub.s32 2048, 2048
          %1245 = vsyncadd %s1231, %s1244
          %s1246 = smul.addr %s28, 16
          %s1247 = sadd.s32 %s1242, %s1246
          %s1248 = smul.addr %s1247, 128
          %s1249 = scalar_lea.hbm %s8, %s1248
          %s1250 = sshll.u32 %s1234, 4
          %s1251 = int_to_ptr.vmem [resolvable:$true] %s1250
          %1256 = dma.vmem_to_hbm [thread:$0]  %s1251, 2048, %s1249, %s1231, 128, 128, 8
        $region56: #{tpu_custom_call.1} parent=47 // pred_fallthru
          _
      $region48: #{tpu_custom_call.1} parent=5 // pred_fallthru
        _
      %p1257 = scmp.le.s32.totalorder 2, %s19
      // Predicated region
      $region57: #{tpu_custom_call.1} parent=5 // pred_check
        %p1258 = pneg %p1257
      $region58: #{tpu_custom_call.1} parent=5 // pred_check_branch
        %1260 = sbr.rel (%p1258) target = $region60
      $region59: #{tpu_custom_call.1} parent=5 // pred_region
        %s1261 = ssub.s32 %s19, 2
        // Predicated region
        $region61: #{tpu_custom_call.1} parent=59 // pred_check
          %p1262 = pneg %p226
        $region62: #{tpu_custom_call.1} parent=59 // pred_check_branch
          %1264 = sbr.rel (%p1262) target = $region64
        $region63: #{tpu_custom_call.1} parent=59 // pred_region
          %s1265 = smul.u32 16, %s31
          %p1266 = scmp.lt.s32.totalorder %s30, 1
          %s1267 = scalar_select %p1266, %s30, 1
          %p1268 = scmp.lt.s32.totalorder %s1265, 15
          %s1269 = scalar_select %p1268, %s1265, 15
          %s1270 = smul.addr %s1267, 16
          %s1271 = sadd.s32 %s1269, %s1270
          %s1272 = smul.addr %s1271, 8
          %s1273 = scalar_lea.vmem %s7, %s1272
        $region64: #{tpu_custom_call.1} parent=59 // pred_fallthru
          _
        // Predicated region
        $region65: #{tpu_custom_call.1} parent=59 // pred_check
          %p1274 = pneg %p254
        $region66: #{tpu_custom_call.1} parent=59 // pred_check_branch
          %1276 = sbr.rel (%p1274) target = $region68
        $region67: #{tpu_custom_call.1} parent=59 // pred_region
          %s1277 = sand.u32 %s239, 1
          %s1278 = scalar_lea.sflag [#allocation4], %s1277
          %s1279 = sand.u32 %s239, 1
          %s1280 = smul.addr %s1279, 128
          %s1281 = scalar_lea.vmem [#allocation3], %s1280
          %1282 = dma.done %s1278, 2048
        $region68: #{tpu_custom_call.1} parent=59 // pred_fallthru
          _
      $region60: #{tpu_custom_call.1} parent=5 // pred_fallthru
        _
    $region6: #{tpu_custom_call.1} parent=1 // loop_footer
      %s23 = sadd.s32 1, %s19
    $region7: #{tpu_custom_call.1} parent=1 // loop_footer_branch
      %18 = sbr.rel target = $region3
    $region8: #{tpu_custom_call.1} parent=1 // loop_exit
      _
    %1283 = vsyncpa [#allocation4], 1
    %s1284 = scalar_lea.sflag [#allocation4], 1
    %1285 = vsyncpa %s1284, 1

</llo_original>
